<compile_context>
chip_gen: v7x
topology: tpu7x:2x2x1
jax: 0.10.0
libtpu: 0.0.40
codegen_flags: <defaults>
</compile_context>

<pallas_src>
import jax
import jax.numpy as jnp
from jax.experimental import pallas as pl
from jax.experimental.pallas import tpu as pltpu

_LANES = 128  # lane-padded weight width for a clean MXU matmul


def _head_kernel(x_ref, w_ref, b_ref, o_ref):
    # x_ref: (TILE_B, D), w_ref: (D, 128), b_ref: (1, 128) f32, o_ref: (TILE_B, num_labels)
    y = jnp.dot(x_ref[...], w_ref[...], preferred_element_type=jnp.float32)
    y = y + b_ref[...]                              # bias add on the full vreg (free)
    o_ref[...] = y[:, : o_ref.shape[-1]].astype(o_ref.dtype)  # narrow masked store


def prepare_out_proj(weight, bias, dtype=jnp.float32):
    """One-time prep (hoist to model init): W [num_labels, D] -> W^T lane-padded [D, 128],
    bias -> [1, 128] f32.  Done once and reused across forward calls."""
    num_labels, d_model = weight.shape
    w_t = jnp.zeros((d_model, _LANES), dtype=dtype)
    w_t = w_t.at[:, :num_labels].set(weight.T.astype(dtype))
    b_p = jnp.zeros((1, _LANES), dtype=jnp.float32)
    b_p = b_p.at[:, :num_labels].set(bias.astype(jnp.float32))
    return w_t, b_p, num_labels


def _cdiv(a, b):
    return (a + b - 1) // b


def _round_up(n, m):
    return _cdiv(n, m) * m


def _choose_tile(batch, d_model, itemsize, tile_b):
    tb = min(tile_b, _round_up(batch, 8))
    # v7x: make sure the parallel batch axis has >=2 grid steps so both TCs get work.
    if batch > 8 and _cdiv(batch, tb) < 2:
        tb = _round_up(_cdiv(batch, 2), 8)
    # VMEM cap: double-buffered x tile + double-buffered weight + output, keep <= ~10 MiB
    # (fits the v5e 16 MiB scoped default; comfortable on v6e/v7x).
    budget = 10 * 1024 * 1024
    fixed = 2 * d_model * _LANES * itemsize + 2 * _LANES * 4          # weight + bias bufs
    per_row = 2 * (d_model * itemsize + _LANES * 4)                   # x + (generous) out
    max_tb = max(8, ((budget - fixed) // per_row) // 8 * 8)
    return max(8, min(tb, max_tb))


def roberta_classification_head_prepared(features, w_t, b_p, num_labels, *, tile_b=512):
    """features: [B, D]; w_t: [D, 128] (prepared); b_p: [1, 128] f32 -> [B, num_labels]."""
    B, D = features.shape
    # Never cast the activation stream in the wrapper; only the tiny weight if needed.
    if w_t.dtype != features.dtype:
        w_t = w_t.astype(features.dtype)

    tb = _choose_tile(B, D, features.dtype.itemsize, tile_b)
    grid = (_cdiv(B, tb),)  # ragged last block when B % tb != 0 (no jnp.pad copy of x)

    return pl.pallas_call(
        _head_kernel,
        out_shape=jax.ShapeDtypeStruct((B, num_labels), features.dtype),
        grid_spec=pltpu.PrefetchScalarGridSpec(
            num_scalar_prefetch=0,
            grid=grid,
            in_specs=[
                pl.BlockSpec((tb, D), lambda i: (i, 0)),        # streamed x tiles
                pl.BlockSpec((D, _LANES), lambda i: (0, 0)),    # weight: constant block
                pl.BlockSpec((1, _LANES), lambda i: (0, 0)),    # bias:   constant block
            ],
            out_specs=pl.BlockSpec((tb, num_labels), lambda i: (i, 0)),
        ),
        compiler_params=pltpu.CompilerParams(
            dimension_semantics=("parallel",)),  # batch tiles are independent
    )(features, w_t, b_p)


def roberta_classification_head(features, weight, bias, *, tile_b=512):
    """Convenience wrapper; for repeated forwards, call prepare_out_proj once instead."""
    # TODO(synk): nn.Dropout is identity here (inference mode).
    w_t, b_p, num_labels = prepare_out_proj(weight, bias, dtype=features.dtype)
    return roberta_classification_head_prepared(features, w_t, b_p, num_labels, tile_b=tile_b)


if __name__ == "__main__":
    key = jax.random.PRNGKey(0)
    k_x, k_w, k_b = jax.random.split(key, 3)

    # Small shapes consistent with the module: batch=8, d_model=32, num_labels=2.
    B, D, NUM_LABELS = 8, 32, 2
    features = jax.random.normal(k_x, (B, D), dtype=jnp.float32)
    weight = jax.random.normal(k_w, (NUM_LABELS, D), dtype=jnp.float32) * 0.02
    bias = jax.random.normal(k_b, (NUM_LABELS,), dtype=jnp.float32) * 0.02

    # One-time weight prep (hoisted out of the per-call path), reused below.
    w_t, b_p, nl = prepare_out_proj(weight, bias, dtype=jnp.float32)

    out = jax.block_until_ready(
        roberta_classification_head_prepared(features, w_t, b_p, nl))
    ref = features @ weight.T + bias
    assert out.shape == (B, NUM_LABELS)
    assert jnp.allclose(out, ref, atol=1e-5, rtol=1e-5)

    # Multi-step grid + ragged last block (B not a multiple of the tile, no padding copy).
    B2 = 20
    features2 = jax.random.normal(k_x, (B2, D), dtype=jnp.float32)
    out2 = jax.block_until_ready(
        roberta_classification_head_prepared(features2, w_t, b_p, nl, tile_b=8))
    ref2 = features2 @ weight.T + bias
    assert out2.shape == (B2, NUM_LABELS)
    assert jnp.allclose(out2, ref2, atol=1e-5, rtol=1e-5)

    # bf16 activation streaming path (x arrives bf16; no wrapper cast of x, loose tolerance).
    features_bf = features.astype(jnp.bfloat16)
    w_t16, b_p16, _ = prepare_out_proj(weight, bias, dtype=jnp.bfloat16)
    out3 = jax.block_until_ready(
        roberta_classification_head_prepared(features_bf, w_t16, b_p16, nl))
    ref3 = (features_bf.astype(jnp.float32)
            @ weight.astype(jnp.bfloat16).astype(jnp.float32).T + bias)
    assert out3.shape == (B, NUM_LABELS)
    assert jnp.allclose(out3.astype(jnp.float32), ref3, atol=2e-2, rtol=2e-2)

    print("KERNEL_OK")
</pallas_src>

<mosaic_0001>
module attributes {stable_mosaic.version = 11 : i64} {
  func.func @_head_kernel(%arg0: i32, %arg1: memref<8x32xf32, #tpu.memory_space<vmem>>, %arg2: memref<32x128xf32, #tpu.memory_space<vmem>>, %arg3: memref<1x128xf32, #tpu.memory_space<vmem>>, %arg4: memref<8x2xf32, #tpu.memory_space<vmem>>) attributes {dimension_semantics = [#tpu.dimension_semantics<parallel>], iteration_bounds = array<i64: 1>, scalar_prefetch = 0 : i64, scratch_operands = 0 : i64, tpu.core_type = #tpu.core_type<tc>, window_params = [{transform_indices = @transform_0, window_bounds = array<i64: 8, 32>}, {pipeline_mode = #tpu.pipeline_mode<synchronous>, transform_indices = @transform_1, window_bounds = array<i64: 32, 128>}, {pipeline_mode = #tpu.pipeline_mode<synchronous>, transform_indices = @transform_2, window_bounds = array<i64: 1, 128>}, {transform_indices = @transform_3, window_bounds = array<i64: 8, 2>}]} {
    %c0 = arith.constant 0 : index
    %c0_0 = arith.constant 0 : index
    %0 = vector.load %arg1[%c0, %c0_0] : memref<8x32xf32, #tpu.memory_space<vmem>>, vector<8x32xf32>
    %c0_1 = arith.constant 0 : index
    %c0_2 = arith.constant 0 : index
    %1 = vector.load %arg2[%c0_1, %c0_2] : memref<32x128xf32, #tpu.memory_space<vmem>>, vector<32x128xf32>
    %cst = arith.constant dense<0.000000e+00> : vector<8x128xf32>
    %2 = tpu.matmul %0, %1, %cst {dimension_numbers = #tpu.dot_dimension_numbers<[1], [0], [0], [1], [0, 0, 1, 1], [], []>} : vector<8x32xf32>, vector<32x128xf32>, vector<8x128xf32> -> vector<8x128xf32>
    %c0_3 = arith.constant 0 : index
    %c0_4 = arith.constant 0 : index
    %3 = vector.load %arg3[%c0_3, %c0_4] : memref<1x128xf32, #tpu.memory_space<vmem>>, vector<1x128xf32>
    %4 = vector.broadcast %3 : vector<1x128xf32> to vector<8x128xf32>
    %5 = arith.addf %2, %4 : vector<8x128xf32>
    %6 = vector.extract_strided_slice %5 {offsets = [0, 0], sizes = [8, 2], strides = [1, 1]} : vector<8x128xf32> to vector<8x2xf32>
    %c0_5 = arith.constant 0 : index
    %c0_6 = arith.constant 0 : index
    %7 = vector.load %arg4[%c0_5, %c0_6] : memref<8x2xf32, #tpu.memory_space<vmem>>, vector<8x2xf32>
    tpu.vector_store %arg4[%c0_5, %c0_6], %6 {strides = array<i32>} : memref<8x2xf32, #tpu.memory_space<vmem>>, vector<8x2xf32>,
    return
  }
  func.func @transform_0(%arg0: i32) -> (i32, i32) {
    %c0_i32 = arith.constant 0 : i32
    %c0_i32_0 = arith.constant 0 : i32
    return %arg0, %c0_i32 : i32, i32
  }
  func.func @transform_1(%arg0: i32) -> (i32, i32) {
    %c0_i32 = arith.constant 0 : i32
    %c0_i32_0 = arith.constant 0 : i32
    %c0_i32_1 = arith.constant 0 : i32
    return %c0_i32, %c0_i32_0 : i32, i32
  }
  func.func @transform_2(%arg0: i32) -> (i32, i32) {
    %c0_i32 = arith.constant 0 : i32
    %c0_i32_0 = arith.constant 0 : i32
    %c0_i32_1 = arith.constant 0 : i32
    return %c0_i32, %c0_i32_0 : i32, i32
  }
  func.func @transform_3(%arg0: i32) -> (i32, i32) {
    %c0_i32 = arith.constant 0 : i32
    %c0_i32_0 = arith.constant 0 : i32
    return %arg0, %c0_i32 : i32, i32
  }
}

</mosaic_0001>

<llo_original>
// kernel: tpu_custom_call.1
$region0: #{tpu_custom_call.1}
  #allocation0 [shape = 'u32[]', space=smem, size = 0x4, offset = 0x4, fixed_abs, tag = 'smem constant byte address 0x4 - core index']
  #allocation1 [shape = 'u32[144,128]{1,0:T(1,128)}', space=vmem, size = 0x12000, scoped, tag = 'internal scratch']
  %s0 = inlined_call_operand.hbm [shape: f32[8,32], index: 0, kind: input, shape index: {}]
  %s1 = inlined_call_operand.hbm [shape: f32[32,128], index: 1, kind: input, shape index: {}]
  %s2 = inlined_call_operand.vmem [shape: f32[1,128], index: 2, kind: input, shape index: {}]
  %s3 = inlined_call_operand.vmem [shape: f32[8,2], index: 3, kind: output, shape index: {}]
  %s4 = sld [smem:[#allocation0]]
  $region30: #{tpu_custom_call.1} parent=0
    _
  %s6 = ssub.s32 1, %s4
  %s7 = scalar_select 0, %s6, %s4
  $region1: #{tpu_custom_call.1} parent=0
    #allocation2 [shape = 'u8[4096]{0}', space=vmem, size = 0x1000, scoped, tag = 'input window, operand 0, single buffered']
    #allocation3 [shape = 's32[1]{0}', space=sflag, size = 0x4, scoped, tag = 'scoped memory for tpu_custom_call.1']
    #allocation4 [shape = 'u8[16384]{0}', space=vmem, size = 0x4000, scoped, tag = 'input window, operand 1, single buffered']
    #allocation5 [shape = 's32[1]{0}', space=sflag, size = 0x4, scoped, tag = 'scoped memory for tpu_custom_call.1']
    %8 = vsyncpa [#allocation3], 0
    %9 = vsyncpa [#allocation5], 0
    // Predicated region
    $region2: #{tpu_custom_call.1} parent=1 // pred_check
      _
    $region3: #{tpu_custom_call.1} parent=1 // pred_check_branch
      %11 = sbr.rel (0) target = $region5
    $region4: #{tpu_custom_call.1} parent=1 // pred_region
      %s13 = ssub.s32 128, 128
      %14 = vsyncadd [#allocation3], %s13
      %s16 = sshll.u32 [#allocation2], 4
      %s17 = int_to_ptr.vmem [resolvable:$true] %s16
      %19 = dma.hbm_to_vmem [thread:$0]  %s0, 128, %s17, [#allocation3]
    $region5: #{tpu_custom_call.1} parent=1 // pred_fallthru
      _
    // Predicated region
    $region6: #{tpu_custom_call.1} parent=1 // pred_check
      _
    $region7: #{tpu_custom_call.1} parent=1 // pred_check_branch
      %21 = sbr.rel (0) target = $region9
    $region8: #{tpu_custom_call.1} parent=1 // pred_region
      %s23 = ssub.s32 512, 512
      %24 = vsyncadd [#allocation5], %s23
      %s25 = sshll.u32 [#allocation4], 4
      %s26 = int_to_ptr.vmem [resolvable:$true] %s25
      %31 = dma.hbm_to_vmem [thread:$0]  %s1, 512, %s26, [#allocation5], 128, 128, 8
    $region9: #{tpu_custom_call.1} parent=1 // pred_fallthru
      _
    // Predicated region
    $region10: #{tpu_custom_call.1} parent=1 // pred_check
      _
    $region11: #{tpu_custom_call.1} parent=1 // pred_check_branch
      %33 = sbr.rel (0) target = $region13
    $region12: #{tpu_custom_call.1} parent=1 // pred_region
      _
    $region13: #{tpu_custom_call.1} parent=1 // pred_fallthru
      _
    // Predicated region
    $region14: #{tpu_custom_call.1} parent=1 // pred_check
      _
    $region15: #{tpu_custom_call.1} parent=1 // pred_check_branch
      %35 = sbr.rel (0) target = $region17
    $region16: #{tpu_custom_call.1} parent=1 // pred_region
      %36 = dma.done [#allocation3], 128
    $region17: #{tpu_custom_call.1} parent=1 // pred_fallthru
      _
    // Predicated region
    $region18: #{tpu_custom_call.1} parent=1 // pred_check
      _
    $region19: #{tpu_custom_call.1} parent=1 // pred_check_branch
      %38 = sbr.rel (0) target = $region21
    $region20: #{tpu_custom_call.1} parent=1 // pred_region
      %39 = dma.done [#allocation5], 512
    $region21: #{tpu_custom_call.1} parent=1 // pred_fallthru
      _
    %v40 = vld [vmem:[#allocation2] sm:$0xff]
    %v41 = vld [vmem:[#allocation4] sm:$0xff]
    %v42 = vld [vmem:[#allocation4 + $0x8] sm:$0xff]
    %v43 = vld [vmem:[#allocation4 + $0x10] sm:$0xff]
    %v44 = vld [vmem:[#allocation4 + $0x18] sm:$0xff]
    %v45 = vld [vmem:[%s2] sm:$0x1]
    %v47 = vlaneseq
    %v48 = vshrl.u32 %v47, 7
    %v49 = vsub.s32 0, %v48
    %v50 = vrot.slane %v45, %v49
    %vm52 = vcmask 261120
    %v54 = vsel %vm52, %v40, 0
    %56 = vmatprep.subr.mxu0 0.0
    %57 = vmatpush1.msra.mxu0 %v41
    %58 = vmatprep.subr.mxu0 0.0
    %59 = vmatpush1.msra.mxu0 %v42
    %60 = vmatprep.subr.mxu0 0.0
    %61 = vmatpush1.msra.mxu0 %v43
    %62 = vmatprep.subr.mxu0 0.0
    %63 = vmatpush1.msra.mxu0 %v44
    %64 = vmatprep.subr.mxu0 0.0
    %65 = vmatpush1.msra.mxu0 0.0
    %66 = vmatprep.subr.mxu0 0.0
    %67 = vmatpush1.msra.mxu0 0.0
    %68 = vmatprep.subr.mxu0 0.0
    %69 = vmatpush1.msra.mxu0 0.0
    %70 = vmatprep.subr.mxu0 0.0
    %71 = vmatpush1.msra.mxu0 0.0
    %72 = vmatprep.subr.mxu0 0.0
    %73 = vmatpush1.msra.mxu0 0.0
    %74 = vmatprep.subr.mxu0 0.0
    %75 = vmatpush1.msra.mxu0 0.0
    %76 = vmatprep.subr.mxu0 0.0
    %77 = vmatpush1.msra.mxu0 0.0
    %78 = vmatprep.subr.mxu0 0.0
    %79 = vmatpush1.msra.mxu0 0.0
    %80 = vmatprep.subr.mxu0 0.0
    %81 = vmatpush1.msra.mxu0 0.0
    %82 = vmatprep.subr.mxu0 0.0
    %83 = vmatpush1.msra.mxu0 0.0
    %84 = vmatprep.subr.mxu0 0.0
    %85 = vmatpush1.msra.mxu0 0.0
    %86 = vmatprep.subr.mxu0 0.0
    %87 = vmatpush1.msra.mxu0 0.0
    %88 = vmatprep.subr.mxu0 0.0
    %89 = vmatpush1.msra.mxu0 0.0
    %90 = vmatprep.subr.mxu0 0.0
    %91 = vmatpush1.msra.mxu0 0.0
    %92 = vmatprep.subr.mxu0 0.0
    %93 = vmatpush1.msra.mxu0 0.0
    %94 = vmatprep.subr.mxu0 0.0
    %95 = vmatpush1.msra.mxu0 0.0
    %96 = vmatprep.subr.mxu0 0.0
    %97 = vmatpush1.msra.mxu0 0.0
    %98 = vmatprep.subr.mxu0 0.0
    %99 = vmatpush1.msra.mxu0 0.0
    %100 = vmatprep.subr.mxu0 0.0
    %101 = vmatpush1.msra.mxu0 0.0
    %102 = vmatprep.subr.mxu0 0.0
    %103 = vmatpush1.msra.mxu0 0.0
    %104 = vmatprep.subr.mxu0 0.0
    %105 = vmatpush1.msra.mxu0 0.0
    %106 = vmatprep.subr.mxu0 0.0
    %107 = vmatpush1.msra.mxu0 0.0
    %108 = vmatprep.subr.mxu0 0.0
    %109 = vmatpush1.msra.mxu0 0.0
    %110 = vmatprep.subr.mxu0 0.0
    %111 = vmatpush1.msra.mxu0 0.0
    %112 = vmatprep.subr.mxu0 0.0
    %113 = vmatpush1.msra.mxu0 0.0
    %114 = vmatprep.subr.mxu0 0.0
    %115 = vmatpush1.msra.mxu0 0.0
    %116 = vmatprep.subr.mxu0 0.0
    %117 = vmatpush1.msra.mxu0 0.0
    %118 = vmatprep.subr.mxu0 0.0
    %119 = vmatpush1.msra.mxu0 0.0
    %120 = vmatprep.mubr.f32.mxu0 0.0
    %121 = vmatmul.mubr.f32.gmra.mrb[0].mxu0 %v54
    %v122 = vpop.f32.mrb[0].mxu0
    %v123 = vadd.f32 %v50, %v122
    %v124 = vpop.f32.mrb[0].mxu0
    %125 = vdwg.mxu0
    %vm126 = vcmask 15360
    %127 = vst.msk [vmem:[%s3] sm:$0xff] %vm126, %v123
    // Predicated region
    $region22: #{tpu_custom_call.1} parent=1 // pred_check
      _
    $region23: #{tpu_custom_call.1} parent=1 // pred_check_branch
      %129 = sbr.rel (0) target = $region25
    $region24: #{tpu_custom_call.1} parent=1 // pred_region
      _
    $region25: #{tpu_custom_call.1} parent=1 // pred_fallthru
      _
    // Predicated region
    $region26: #{tpu_custom_call.1} parent=1 // pred_check
      _
    $region27: #{tpu_custom_call.1} parent=1 // pred_check_branch
      %131 = sbr.rel (0) target = $region29
    $region28: #{tpu_custom_call.1} parent=1 // pred_region
      _
    $region29: #{tpu_custom_call.1} parent=1 // pred_fallthru
      _
    %132 = vsyncpa [#allocation3], 1
    %133 = vsyncpa [#allocation5], 1

</llo_original>
